<compile_context>
chip_gen: v5e
topology: v5e:2x2
jax: 0.10.0
libtpu: 0.0.40
codegen_flags: <defaults>
</compile_context>

<pallas_src>
import functools

import jax
import jax.numpy as jnp
from jax.experimental import pallas as pl
from jax.experimental.pallas import tpu as pltpu


def _round_up(v, m):
    return (v + m - 1) // m * m


def patch_embed_kernel(p_ref, w_ref, pb_ref, o_ref):
    """One row-tile of the flattened patch matrix.

    p_ref : (RT, K_pad)    bf16  im2col'd patches (RT = imgs_per_step * N rows)
    w_ref : (K_pad, E_pad) bf16  conv weight, reshaped + zero-padded (resident)
    pb_ref: (RT, E_pad)    f32   pre-folded pos_embed[1:] + conv bias (resident)
    o_ref : (RT, E_pad)    f32
    """
    emb = jnp.dot(p_ref[...], w_ref[...],
                  preferred_element_type=jnp.float32)      # MXU, f32 accumulate
    o_ref[...] = emb + pb_ref[...]                         # single f32 VPU pass


def _pick_images_per_step(B, N, K_pad):
    """Rows per grid step: a divisor of B giving 8-aligned row blocks, with the
    patch tile small enough to double-buffer (<=4 MiB bf16), preferring the
    largest such block that stays <= 1024 rows."""
    best = B
    for d in range(B, 0, -1):
        rows = d * N
        if B % d == 0 and (rows % 8 == 0 or d == B) and rows * K_pad * 2 <= (4 << 20):
            best = d
            if rows <= 1024:
                break
    return best


@functools.partial(jax.jit, static_argnames=("patch",))
def patch_positional_embedding(x, conv_w, conv_b, class_token, pos_embed, patch):
    """x: (B, C, H, W) f32.  Returns (B, N+1, E) f32 (matches the PyTorch module)."""
    B, C, H, W = x.shape
    E = conv_w.shape[0]
    P = patch
    Hp, Wp = H // P, W // P
    N = Hp * Wp
    K = C * P * P
    K_pad = _round_up(K, 128)          # lane-dense A-matrix loads
    E_pad = _round_up(E, 128)          # lane-dense output stores (unmasked vst)

    # --- im2col (space-to-depth), fused with the bf16 cast under jit ---------
    xb = x.astype(jnp.bfloat16)
    patches = xb.reshape(B, C, Hp, P, Wp, P)
    patches = patches.transpose(0, 2, 4, 1, 3, 5).reshape(B * N, K)     # (B*N, K)
    if K_pad != K:
        patches = jnp.pad(patches, ((0, 0), (0, K_pad - K)))

    # Conv weight -> (K_pad, E_pad), bf16 for the MXU (zero pads are inert).
    w_mat = conv_w.reshape(E, K).T.astype(jnp.bfloat16)
    w_mat = jnp.pad(w_mat, ((0, K_pad - K), (0, E_pad - E)))

    # Pre-fold the conv bias into the patch rows of the positional embedding
    # (epilogue add stays f32 -- safe on v5e which has no bf16 VPU).
    pos_patch = pos_embed[0, 1:, :] + conv_b[None, :]                   # (N, E)
    if E_pad != E:
        pos_patch = jnp.pad(pos_patch, ((0, 0), (0, E_pad - E)))

    imgs = _pick_images_per_step(B, N, K_pad)
    rows = imgs * N
    # pos is batch-invariant, so one (rows, E_pad) tile is reused by every step
    # (resident in VMEM, DMA'd once).
    pos_tiled = jnp.tile(pos_patch, (imgs, 1))                          # (rows, E_pad)

    out2d = pl.pallas_call(
        patch_embed_kernel,
        out_shape=jax.ShapeDtypeStruct((B * N, E_pad), jnp.float32),
        grid=(B // imgs,),
        in_specs=[
            pl.BlockSpec((rows, K_pad), lambda i: (i, 0)),
            pl.BlockSpec((K_pad, E_pad), lambda i: (0, 0)),   # resident across steps
            pl.BlockSpec((rows, E_pad), lambda i: (0, 0)),    # resident across steps
        ],
        out_specs=pl.BlockSpec((rows, E_pad), lambda i: (i, 0)),
        compiler_params=pltpu.CompilerParams(
            dimension_semantics=("parallel",)),               # shard over 2 TCs on v7x
    )(patches, w_mat, pos_tiled)

    out = out2d.reshape(B, N, E_pad)
    if E_pad != E:
        out = out[..., :E]

    # cls row handled outside the matmul path (tiny; avoids the odd-length
    # (N+1, E) intermediate and the in-kernel concat / misaligned stores).
    cls_row = class_token.reshape(1, 1, E) + pos_embed[:, :1, :]        # (1, 1, E)
    cls_rows = jnp.broadcast_to(cls_row, (B, 1, E))
    return jnp.concatenate([cls_rows, out], axis=1)                     # (B, N+1, E)


def reference(x, conv_w, conv_b, class_token, pos_embed, patch):
    B, C, H, W = x.shape
    E = conv_w.shape[0]
    P = patch
    Hp, Wp = H // P, W // P
    N = Hp * Wp
    K = C * P * P
    patches = x.reshape(B, C, Hp, P, Wp, P).transpose(0, 2, 4, 1, 3, 5).reshape(B, N, K)
    emb = patches @ conv_w.reshape(E, K).T + conv_b[None, None, :]
    cls = jnp.broadcast_to(class_token, (B, 1, E))
    full = jnp.concatenate([cls, emb], axis=1)
    return full + pos_embed


if __name__ == "__main__":
    # Small shapes consistent with the module's forward.
    B, C, H, W = 2, 4, 16, 16
    P = 4                     # patch_resolution
    E = 32                    # flatten_dimensions (embedding dim)
    N = (H // P) * (W // P)   # 16 patches -> seq len 17

    key = jax.random.PRNGKey(0)
    kx, kw, kb, kc, kp = jax.random.split(key, 5)

    x = jax.random.normal(kx, (B, C, H, W), dtype=jnp.float32)
    conv_w = jax.random.normal(kw, (E, C, P, P), dtype=jnp.float32) * 0.02
    conv_b = jax.random.normal(kb, (E,), dtype=jnp.float32) * 0.02
    class_token = jax.random.normal(kc, (1, 1, E), dtype=jnp.float32)
    pos_embed = jax.random.normal(kp, (1, N + 1, E), dtype=jnp.float32)

    out = patch_positional_embedding(x, conv_w, conv_b, class_token, pos_embed, P)
    out = jax.block_until_ready(out)

    ref = reference(x, conv_w, conv_b, class_token, pos_embed, P)
    assert out.shape == (B, N + 1, E), out.shape
    # bf16 matmul operands (f32 accumulate) -> tolerance loosened vs pure f32.
    assert jnp.allclose(out, ref, atol=2e-2, rtol=2e-2), \
        float(jnp.max(jnp.abs(out - ref)))
    print("KERNEL_OK")
</pallas_src>

<mosaic_0001>
module attributes {stable_mosaic.version = 11 : i64} {
  func.func @patch_embed_kernel(%arg0: i32, %arg1: memref<32x128xbf16, #tpu.memory_space<vmem>>, %arg2: memref<128x128xbf16, #tpu.memory_space<vmem>>, %arg3: memref<32x128xf32, #tpu.memory_space<vmem>>, %arg4: memref<32x128xf32, #tpu.memory_space<vmem>>) attributes {dimension_semantics = [#tpu.dimension_semantics<parallel>], iteration_bounds = array<i64: 1>, scalar_prefetch = 0 : i64, scratch_operands = 0 : i64, tpu.core_type = #tpu.core_type<tc>, window_params = [{transform_indices = @transform_0, window_bounds = array<i64: 32, 128>}, {pipeline_mode = #tpu.pipeline_mode<synchronous>, transform_indices = @transform_1, window_bounds = array<i64: 128, 128>}, {pipeline_mode = #tpu.pipeline_mode<synchronous>, transform_indices = @transform_2, window_bounds = array<i64: 32, 128>}, {transform_indices = @transform_3, window_bounds = array<i64: 32, 128>}]} {
    %c0 = arith.constant 0 : index
    %c0_0 = arith.constant 0 : index
    %0 = vector.load %arg1[%c0, %c0_0] : memref<32x128xbf16, #tpu.memory_space<vmem>>, vector<32x128xbf16>
    %c0_1 = arith.constant 0 : index
    %c0_2 = arith.constant 0 : index
    %1 = vector.load %arg2[%c0_1, %c0_2] : memref<128x128xbf16, #tpu.memory_space<vmem>>, vector<128x128xbf16>
    %cst = arith.constant dense<0.000000e+00> : vector<32x128xf32>
    %2 = tpu.matmul %0, %1, %cst {dimension_numbers = #tpu.dot_dimension_numbers<[1], [0], [0], [1], [0, 0, 1, 1], [], []>} : vector<32x128xbf16>, vector<128x128xbf16>, vector<32x128xf32> -> vector<32x128xf32>
    %c0_3 = arith.constant 0 : index
    %c0_4 = arith.constant 0 : index
    %3 = vector.load %arg3[%c0_3, %c0_4] : memref<32x128xf32, #tpu.memory_space<vmem>>, vector<32x128xf32>
    %4 = arith.addf %2, %3 : vector<32x128xf32>
    %c0_5 = arith.constant 0 : index
    %c0_6 = arith.constant 0 : index
    %5 = vector.load %arg4[%c0_5, %c0_6] : memref<32x128xf32, #tpu.memory_space<vmem>>, vector<32x128xf32>
    tpu.vector_store %arg4[%c0_5, %c0_6], %4 {strides = array<i32>} : memref<32x128xf32, #tpu.memory_space<vmem>>, vector<32x128xf32>,
    return
  }
  func.func @transform_0(%arg0: i32) -> (i32, i32) {
    %c0_i32 = arith.constant 0 : i32
    %c0_i32_0 = arith.constant 0 : i32
    return %arg0, %c0_i32 : i32, i32
  }
  func.func @transform_1(%arg0: i32) -> (i32, i32) {
    %c0_i32 = arith.constant 0 : i32
    %c0_i32_0 = arith.constant 0 : i32
    %c0_i32_1 = arith.constant 0 : i32
    return %c0_i32, %c0_i32_0 : i32, i32
  }
  func.func @transform_2(%arg0: i32) -> (i32, i32) {
    %c0_i32 = arith.constant 0 : i32
    %c0_i32_0 = arith.constant 0 : i32
    %c0_i32_1 = arith.constant 0 : i32
    return %c0_i32, %c0_i32_0 : i32, i32
  }
  func.func @transform_3(%arg0: i32) -> (i32, i32) {
    %c0_i32 = arith.constant 0 : i32
    %c0_i32_0 = arith.constant 0 : i32
    return %arg0, %c0_i32 : i32, i32
  }
}

</mosaic_0001>

<llo_original>
// kernel: patch_positional_embedding.1
$region0: #{patch_positional_embedding.1}
  #allocation0 [shape = 'u32[]', space=smem, size = 0x4, offset = 0x4, fixed_abs, tag = 'smem constant byte address 0x4 - core index']
  #allocation1 [shape = 'u32[72,128]{1,0:T(1,128)}', space=vmem, size = 0x9000, scoped, tag = 'internal scratch']
  %s0 = inlined_call_operand.vmem [shape: bf16[32,128], index: 0, kind: input, shape index: {}]
  %s1 = inlined_call_operand.vmem [shape: bf16[128,128], index: 1, kind: input, shape index: {}]
  %s2 = inlined_call_operand.vmem [shape: f32[32,128], index: 2, kind: input, shape index: {}]
  %s3 = inlined_call_operand.vmem [shape: f32[32,128], index: 3, kind: output, shape index: {}]
  %s4 = sld [smem:[#allocation0]]
  $region22: #{patch_positional_embedding.1} parent=0
    _
  %s6 = ssub.s32 1, %s4
  %s7 = scalar_select 0, %s6, %s4
  // Predicated region
  $region2: #{patch_positional_embedding.1} parent=0 // pred_check
    _
  $region3: #{patch_positional_embedding.1} parent=0 // pred_check_branch
    %9 = sbr.rel (0) target = $region5
  $region4: #{patch_positional_embedding.1} parent=0 // pred_region
    _
  $region5: #{patch_positional_embedding.1} parent=0 // pred_fallthru
    _
  // Predicated region
  $region6: #{patch_positional_embedding.1} parent=0 // pred_check
    _
  $region7: #{patch_positional_embedding.1} parent=0 // pred_check_branch
    %11 = sbr.rel (0) target = $region9
  $region8: #{patch_positional_embedding.1} parent=0 // pred_region
    _
  $region9: #{patch_positional_embedding.1} parent=0 // pred_fallthru
    _
  // Predicated region
  $region10: #{patch_positional_embedding.1} parent=0 // pred_check
    _
  $region11: #{patch_positional_embedding.1} parent=0 // pred_check_branch
    %13 = sbr.rel (0) target = $region13
  $region12: #{patch_positional_embedding.1} parent=0 // pred_region
    _
  $region13: #{patch_positional_embedding.1} parent=0 // pred_fallthru
    _
  %v14 = vld [vmem:[%s0] sm:$0xf]
  %v15 = vld [vmem:[%s0 + $0x4] sm:$0xf]
  %v16 = vld [vmem:[%s0 + $0x8] sm:$0xf]
  %v17 = vld [vmem:[%s0 + $0xc] sm:$0xf]
  %v18 = vld [vmem:[%s1] sm:$0xf]
  %v19 = vld [vmem:[%s1 + $0x4] sm:$0xf]
  %v20 = vld [vmem:[%s1 + $0x8] sm:$0xf]
  %v21 = vld [vmem:[%s1 + $0xc] sm:$0xf]
  %v22 = vld [vmem:[%s1 + $0x10] sm:$0xf]
  %v23 = vld [vmem:[%s1 + $0x14] sm:$0xf]
  %v24 = vld [vmem:[%s1 + $0x18] sm:$0xf]
  %v25 = vld [vmem:[%s1 + $0x1c] sm:$0xf]
  %v26 = vld [vmem:[%s1 + $0x20] sm:$0xf]
  %v27 = vld [vmem:[%s1 + $0x24] sm:$0xf]
  %v28 = vld [vmem:[%s1 + $0x28] sm:$0xf]
  %v29 = vld [vmem:[%s1 + $0x2c] sm:$0xf]
  %v30 = vld [vmem:[%s1 + $0x30] sm:$0xf]
  %v31 = vld [vmem:[%s1 + $0x34] sm:$0xf]
  %v32 = vld [vmem:[%s1 + $0x38] sm:$0xf]
  %v33 = vld [vmem:[%s1 + $0x3c] sm:$0xf]
  %v34 = vld [vmem:[%s2] sm:$0xff]
  %v35 = vld [vmem:[%s2 + $0x8] sm:$0xff]
  %v36 = vld [vmem:[%s2 + $0x10] sm:$0xff]
  %v37 = vld [vmem:[%s2 + $0x18] sm:$0xff]
  %v42 = vunpack.c.l.b16 %v14
  %v43 = vunpack.c.l.b16 %v15
  %v44 = vunpack.c.l.b16 %v16
  %v45 = vunpack.c.l.b16 %v17
  %v46 = vpack.c.b16 %v43, %v42
  %v47 = vpack.c.b16 %v45, %v44
  %v66 = vunpack.c.l.b16 %v18
  %v67 = vunpack.c.l.b16 %v19
  %v68 = vunpack.c.l.b16 %v20
  %v69 = vunpack.c.l.b16 %v21
  %v70 = vunpack.c.l.b16 %v22
  %v71 = vunpack.c.l.b16 %v23
  %v72 = vunpack.c.l.b16 %v24
  %v73 = vunpack.c.l.b16 %v25
  %v74 = vunpack.c.l.b16 %v26
  %v75 = vunpack.c.l.b16 %v27
  %v76 = vunpack.c.l.b16 %v28
  %v77 = vunpack.c.l.b16 %v29
  %v78 = vunpack.c.l.b16 %v30
  %v79 = vunpack.c.l.b16 %v31
  %v80 = vunpack.c.l.b16 %v32
  %v81 = vunpack.c.l.b16 %v33
  %v82 = vpack.c.b16 %v67, %v66
  %v83 = vpack.c.b16 %v69, %v68
  %v84 = vpack.c.b16 %v71, %v70
  %v85 = vpack.c.b16 %v73, %v72
  %v86 = vpack.c.b16 %v75, %v74
  %v87 = vpack.c.b16 %v77, %v76
  %v88 = vpack.c.b16 %v79, %v78
  %v89 = vpack.c.b16 %v81, %v80
  %98 = vmatpush.bf16.msra.mxu0 %v89
  %99 = vmatpush.bf16.msra.mxu0 %v88
  %100 = vmatpush.bf16.msra.mxu0 %v87
  %101 = vmatpush.bf16.msra.mxu0 %v86
  %102 = vmatpush.bf16.msra.mxu0 %v85
  %103 = vmatpush.bf16.msra.mxu0 %v84
  %104 = vmatpush.bf16.msra.mxu0 %v83
  %105 = vmatpush.bf16.msra.mxu0 %v82
  %106 = vmatmul.bf16.gmra.mxu0 %v46
  %v107 = vpop.f32.mrf.mxu0
  %v108 = vadd.f32 %v34, %v107
  %v109 = vpop.f32.mrf.mxu0
  %v110 = vadd.f32 %v35, %v109
  %111 = vmatmul.bf16.gmra.mxu0 %v47
  %v112 = vpop.f32.mrf.mxu0
  %v113 = vadd.f32 %v36, %v112
  %v114 = vpop.f32.mrf.mxu0
  %v115 = vadd.f32 %v37, %v114
  %116 = vdwg.mxu0
  %117 = vst [vmem:[%s3] sm:$0xff] %v108
  %118 = vst [vmem:[%s3 + $0x8] sm:$0xff] %v110
  %119 = vst [vmem:[%s3 + $0x10] sm:$0xff] %v113
  %120 = vst [vmem:[%s3 + $0x18] sm:$0xff] %v115
  // Predicated region
  $region14: #{patch_positional_embedding.1} parent=0 // pred_check
    _
  $region15: #{patch_positional_embedding.1} parent=0 // pred_check_branch
    %122 = sbr.rel (0) target = $region17
  $region16: #{patch_positional_embedding.1} parent=0 // pred_region
    _
  $region17: #{patch_positional_embedding.1} parent=0 // pred_fallthru
    _
  // Predicated region
  $region18: #{patch_positional_embedding.1} parent=0 // pred_check
    _
  $region19: #{patch_positional_embedding.1} parent=0 // pred_check_branch
    %124 = sbr.rel (0) target = $region21
  $region20: #{patch_positional_embedding.1} parent=0 // pred_region
    _
  $region21: #{patch_positional_embedding.1} parent=0 // pred_fallthru
    _

</llo_original>
